<compile_context>
chip_gen: v5e
topology: v5e:2x2
jax: 0.10.0
libtpu: 0.0.40
codegen_flags: <defaults>
</compile_context>

<pallas_src>
import functools

import jax
import jax.numpy as jnp
from jax.experimental import pallas as pl
from jax.experimental.pallas import tpu as pltpu

EMBEDDING_DIM = 256
FEED_FORWARD_DIM = 256


def _round_up(n, m):
    return ((n + m - 1) // m) * m


def _ffn_kernel(x_ref, w1_ref, b1_ref, w2_ref, b2_ref, o_ref):
    # x tile cast to bf16 (MXU-native), weights arrive pre-cast to bf16,
    # accumulation / bias / ReLU in f32 (VPU filler under the MXU/DMA).
    x = x_ref[...].astype(jnp.bfloat16)
    h = jnp.dot(x, w1_ref[...], preferred_element_type=jnp.float32)
    h = h + b1_ref[...]
    h = jnp.maximum(h, 0.0)                                     # ReLU
    y = jnp.dot(h.astype(jnp.bfloat16), w2_ref[...],
                preferred_element_type=jnp.float32)
    y = y + b2_ref[...]
    o_ref[...] = y.astype(o_ref.dtype)


def _pick_row_tile(M):
    """Row tile: (8,128)-legal, MXU-aligned for big M, >=2 grid steps when
    it matters (v7x megacore), small padding waste."""
    if M <= 256:
        # Tiny-M: don't pad to 256; just satisfy the f32 sublane multiple.
        return max(8, _round_up(M, 8))
    tm = 256
    for cand in (512, 1024, 2048):
        Mp_c = _round_up(M, cand)
        # keep >=2 grid steps (so v7x's 2 TCs shard) and <half-a-tile padding
        if Mp_c // cand >= 2 and (Mp_c - M) < cand // 2:
            tm = cand
    return tm


@functools.partial(jax.jit, static_argnames=("tm",))
def feed_forward(x, w1, b1, w2, b2, *, tm=None):
    """x: (..., EMBEDDING_DIM) -> (..., EMBEDDING_DIM)."""
    orig_shape = x.shape
    D = orig_shape[-1]
    assert D == EMBEDDING_DIM
    F = w1.shape[-1]
    assert F == FEED_FORWARD_DIM

    x2 = x.reshape(-1, D)
    M = x2.shape[0]

    if tm is None:
        tm = _pick_row_tile(M)
    else:
        tm = int(tm)
        tm = max(8, min(tm, 2048))
        tm = _round_up(tm, 8)

    # Pad the row axis to a multiple of tm; padded rows are sliced off below.
    Mp = _round_up(M, tm)
    if Mp != M:
        x2 = jnp.pad(x2, ((0, Mp - M), (0, 0)))
    grid = (Mp // tm,)

    # Hoist weight casts out of the kernel: bf16 operands for the MXU, f32
    # biases for the f32 epilogue.
    w1b = w1.astype(jnp.bfloat16)
    w2b = w2.astype(jnp.bfloat16)
    b1f = b1.astype(jnp.float32).reshape(1, F)
    b2f = b2.astype(jnp.float32).reshape(1, D)

    itemsize = jnp.dtype(x.dtype).itemsize
    cost = pl.CostEstimate(
        flops=4 * Mp * D * F,                       # two (tm,D)x(D,F) matmuls
        transcendentals=0,
        bytes_accessed=(
            Mp * D * itemsize                       # x read
            + Mp * D * itemsize                     # out write
            + (D * F + F * D) * 2                   # bf16 weights
            + (F + D) * 4                           # f32 biases
        ),
    )

    out = pl.pallas_call(
        _ffn_kernel,
        out_shape=jax.ShapeDtypeStruct((Mp, D), x.dtype),
        grid_spec=pltpu.PrefetchScalarGridSpec(
            num_scalar_prefetch=0,
            grid=grid,
            in_specs=[
                pl.BlockSpec((tm, D), lambda i: (i, 0)),   # x row tile (streamed)
                pl.BlockSpec((D, F), lambda i: (0, 0)),    # W1 bf16 (resident)
                pl.BlockSpec((1, F), lambda i: (0, 0)),    # b1 f32
                pl.BlockSpec((F, D), lambda i: (0, 0)),    # W2 bf16 (resident)
                pl.BlockSpec((1, D), lambda i: (0, 0)),    # b2 f32
            ],
            out_specs=pl.BlockSpec((tm, D), lambda i: (i, 0)),
        ),
        compiler_params=pltpu.CompilerParams(
            # rows shard across v7x's 2 TensorCores when grid >= 2
            dimension_semantics=("parallel",),
            # v5e's scoped default is 16 MiB; big tiles need more headroom
            vmem_limit_bytes=(48 * 1024 * 1024) if tm >= 1024 else None,
        ),
        cost_estimate=cost,
    )(x2, w1b, b1f, w2b, b2f)

    if Mp != M:
        out = out[:M]
    return out.reshape(orig_shape)


def init_params(key, dtype=jnp.float32):
    """Deterministic init mimicking nn.Linear's uniform(-1/sqrt(fan_in), +)."""
    k1, k2, k3, k4 = jax.random.split(key, 4)
    bound1 = 1.0 / (EMBEDDING_DIM ** 0.5)
    bound2 = 1.0 / (FEED_FORWARD_DIM ** 0.5)
    # Stored as (in, out) so the kernel does x @ W (== PyTorch x @ W.T).
    w1 = jax.random.uniform(k1, (EMBEDDING_DIM, FEED_FORWARD_DIM),
                            dtype, -bound1, bound1)
    b1 = jax.random.uniform(k2, (1, FEED_FORWARD_DIM), dtype, -bound1, bound1)
    w2 = jax.random.uniform(k3, (FEED_FORWARD_DIM, EMBEDDING_DIM),
                            dtype, -bound2, bound2)
    b2 = jax.random.uniform(k4, (1, EMBEDDING_DIM), dtype, -bound2, bound2)
    return w1, b1, w2, b2


if __name__ == "__main__":
    key = jax.random.PRNGKey(0)
    kx, kp = jax.random.split(key)

    batch, seq = 2, 8
    x = jax.random.normal(kx, (batch, seq, EMBEDDING_DIM), jnp.float32)
    w1, b1, w2, b2 = init_params(kp)

    y = feed_forward(x, w1, b1, w2, b2)
    y = jax.block_until_ready(y)
    assert y.shape == x.shape

    # Reference 1: identical math (bf16 operands, f32 accumulation).
    x2 = x.reshape(-1, EMBEDDING_DIM)
    hb = jnp.dot(x2.astype(jnp.bfloat16), w1.astype(jnp.bfloat16),
                 preferred_element_type=jnp.float32) + b1
    hb = jnp.maximum(hb, 0.0)
    ref_bf16 = jnp.dot(hb.astype(jnp.bfloat16), w2.astype(jnp.bfloat16),
                       preferred_element_type=jnp.float32) + b2
    ref_bf16 = ref_bf16.reshape(x.shape).astype(x.dtype)
    assert jnp.allclose(y, ref_bf16, atol=1e-3, rtol=1e-3)

    # Reference 2: full-f32 PyTorch-equivalent math (loose tol for bf16 dots).
    ref_f32 = (jnp.maximum(x2 @ w1 + b1, 0.0) @ w2 + b2).reshape(x.shape)
    assert jnp.allclose(y, ref_f32, atol=5e-2, rtol=5e-2)

    print("KERNEL_OK")
</pallas_src>

<mosaic_0001>
module attributes {stable_mosaic.version = 11 : i64} {
  func.func @_ffn_kernel(%arg0: i32, %arg1: memref<16x256xf32, #tpu.memory_space<vmem>>, %arg2: memref<256x256xbf16, #tpu.memory_space<vmem>>, %arg3: memref<1x256xf32, #tpu.memory_space<vmem>>, %arg4: memref<256x256xbf16, #tpu.memory_space<vmem>>, %arg5: memref<1x256xf32, #tpu.memory_space<vmem>>, %arg6: memref<16x256xf32, #tpu.memory_space<vmem>>) attributes {dimension_semantics = [#tpu.dimension_semantics<parallel>], iteration_bounds = array<i64: 1>, scalar_prefetch = 0 : i64, scratch_operands = 0 : i64, tpu.core_type = #tpu.core_type<tc>, window_params = [{transform_indices = @transform_0, window_bounds = array<i64: 16, 256>}, {pipeline_mode = #tpu.pipeline_mode<synchronous>, transform_indices = @transform_1, window_bounds = array<i64: 256, 256>}, {pipeline_mode = #tpu.pipeline_mode<synchronous>, transform_indices = @transform_2, window_bounds = array<i64: 1, 256>}, {pipeline_mode = #tpu.pipeline_mode<synchronous>, transform_indices = @transform_3, window_bounds = array<i64: 256, 256>}, {pipeline_mode = #tpu.pipeline_mode<synchronous>, transform_indices = @transform_4, window_bounds = array<i64: 1, 256>}, {transform_indices = @transform_5, window_bounds = array<i64: 16, 256>}]} {
    %c0 = arith.constant 0 : index
    %c0_0 = arith.constant 0 : index
    %0 = vector.load %arg1[%c0, %c0_0] : memref<16x256xf32, #tpu.memory_space<vmem>>, vector<16x256xf32>
    %1 = arith.truncf %0 : vector<16x256xf32> to vector<16x256xbf16>
    %c0_1 = arith.constant 0 : index
    %c0_2 = arith.constant 0 : index
    %2 = vector.load %arg2[%c0_1, %c0_2] : memref<256x256xbf16, #tpu.memory_space<vmem>>, vector<256x256xbf16>
    %cst = arith.constant dense<0.000000e+00> : vector<16x256xf32>
    %3 = tpu.matmul %1, %2, %cst {dimension_numbers = #tpu.dot_dimension_numbers<[1], [0], [0], [1], [0, 0, 1, 1], [], []>} : vector<16x256xbf16>, vector<256x256xbf16>, vector<16x256xf32> -> vector<16x256xf32>
    %c0_3 = arith.constant 0 : index
    %c0_4 = arith.constant 0 : index
    %4 = vector.load %arg3[%c0_3, %c0_4] : memref<1x256xf32, #tpu.memory_space<vmem>>, vector<1x256xf32>
    %5 = vector.broadcast %4 : vector<1x256xf32> to vector<16x256xf32>
    %6 = arith.addf %3, %5 : vector<16x256xf32>
    %cst_5 = arith.constant 0.000000e+00 : f32
    %7 = vector.broadcast %cst_5 : f32 to vector<16x256xf32>
    %8 = arith.maximumf %6, %7 : vector<16x256xf32>
    %9 = arith.truncf %8 : vector<16x256xf32> to vector<16x256xbf16>
    %c0_6 = arith.constant 0 : index
    %c0_7 = arith.constant 0 : index
    %10 = vector.load %arg4[%c0_6, %c0_7] : memref<256x256xbf16, #tpu.memory_space<vmem>>, vector<256x256xbf16>
    %cst_8 = arith.constant dense<0.000000e+00> : vector<16x256xf32>
    %11 = tpu.matmul %9, %10, %cst_8 {dimension_numbers = #tpu.dot_dimension_numbers<[1], [0], [0], [1], [0, 0, 1, 1], [], []>} : vector<16x256xbf16>, vector<256x256xbf16>, vector<16x256xf32> -> vector<16x256xf32>
    %c0_9 = arith.constant 0 : index
    %c0_10 = arith.constant 0 : index
    %12 = vector.load %arg5[%c0_9, %c0_10] : memref<1x256xf32, #tpu.memory_space<vmem>>, vector<1x256xf32>
    %13 = vector.broadcast %12 : vector<1x256xf32> to vector<16x256xf32>
    %14 = arith.addf %11, %13 : vector<16x256xf32>
    %c0_11 = arith.constant 0 : index
    %c0_12 = arith.constant 0 : index
    %15 = vector.load %arg6[%c0_11, %c0_12] : memref<16x256xf32, #tpu.memory_space<vmem>>, vector<16x256xf32>
    tpu.vector_store %arg6[%c0_11, %c0_12], %14 {strides = array<i32>} : memref<16x256xf32, #tpu.memory_space<vmem>>, vector<16x256xf32>,
    return
  }
  func.func @transform_0(%arg0: i32) -> (i32, i32) {
    %c0_i32 = arith.constant 0 : i32
    %c0_i32_0 = arith.constant 0 : i32
    return %arg0, %c0_i32 : i32, i32
  }
  func.func @transform_1(%arg0: i32) -> (i32, i32) {
    %c0_i32 = arith.constant 0 : i32
    %c0_i32_0 = arith.constant 0 : i32
    %c0_i32_1 = arith.constant 0 : i32
    return %c0_i32, %c0_i32_0 : i32, i32
  }
  func.func @transform_2(%arg0: i32) -> (i32, i32) {
    %c0_i32 = arith.constant 0 : i32
    %c0_i32_0 = arith.constant 0 : i32
    %c0_i32_1 = arith.constant 0 : i32
    return %c0_i32, %c0_i32_0 : i32, i32
  }
  func.func @transform_3(%arg0: i32) -> (i32, i32) {
    %c0_i32 = arith.constant 0 : i32
    %c0_i32_0 = arith.constant 0 : i32
    %c0_i32_1 = arith.constant 0 : i32
    return %c0_i32, %c0_i32_0 : i32, i32
  }
  func.func @transform_4(%arg0: i32) -> (i32, i32) {
    %c0_i32 = arith.constant 0 : i32
    %c0_i32_0 = arith.constant 0 : i32
    %c0_i32_1 = arith.constant 0 : i32
    return %c0_i32, %c0_i32_0 : i32, i32
  }
  func.func @transform_5(%arg0: i32) -> (i32, i32) {
    %c0_i32 = arith.constant 0 : i32
    %c0_i32_0 = arith.constant 0 : i32
    return %arg0, %c0_i32 : i32, i32
  }
}

</mosaic_0001>

<llo_original>
// kernel: feed_forward.1
$region0: #{feed_forward.1}
  #allocation0 [shape = 'u32[]', space=smem, size = 0x4, offset = 0x4, fixed_abs, tag = 'smem constant byte address 0x4 - core index']
  #allocation1 [shape = 'u32[72,128]{1,0:T(1,128)}', space=vmem, size = 0x9000, scoped, tag = 'internal scratch']
  %s0 = inlined_call_operand.vmem [shape: f32[16,256], index: 0, kind: input, shape index: {}]
  %s1 = inlined_call_operand.vmem [shape: bf16[256,256], index: 1, kind: input, shape index: {}]
  %s2 = inlined_call_operand.vmem [shape: f32[1,256], index: 2, kind: input, shape index: {}]
  %s3 = inlined_call_operand.vmem [shape: bf16[256,256], index: 3, kind: input, shape index: {}]
  %s4 = inlined_call_operand.vmem [shape: f32[1,256], index: 4, kind: input, shape index: {}]
  %s5 = inlined_call_operand.hbm [shape: f32[16,256], index: 5, kind: output, shape index: {}]
  %s6 = sld [smem:[#allocation0]]
  $region30: #{feed_forward.1} parent=0
    _
  %s8 = ssub.s32 1, %s6
  %s9 = scalar_select 0, %s8, %s6
  $region1: #{feed_forward.1} parent=0
    #allocation2 [shape = 'u8[16384]{0}', space=vmem, size = 0x4000, scoped, tag = 'output window, operand 0, single buffered']
    #allocation3 [shape = 's32[1]{0}', space=sflag, size = 0x4, scoped, tag = 'scoped memory for feed_forward.1']
    %10 = vsyncpa [#allocation3], 0
    // Predicated region
    $region2: #{feed_forward.1} parent=1 // pred_check
      _
    $region3: #{feed_forward.1} parent=1 // pred_check_branch
      %12 = sbr.rel (0) target = $region5
    $region4: #{feed_forward.1} parent=1 // pred_region
      _
    $region5: #{feed_forward.1} parent=1 // pred_fallthru
      _
    // Predicated region
    $region6: #{feed_forward.1} parent=1 // pred_check
      _
    $region7: #{feed_forward.1} parent=1 // pred_check_branch
      %14 = sbr.rel (0) target = $region9
    $region8: #{feed_forward.1} parent=1 // pred_region
      _
    $region9: #{feed_forward.1} parent=1 // pred_fallthru
      _
    // Predicated region
    $region10: #{feed_forward.1} parent=1 // pred_check
      _
    $region11: #{feed_forward.1} parent=1 // pred_check_branch
      %16 = sbr.rel (0) target = $region13
    $region12: #{feed_forward.1} parent=1 // pred_region
      _
    $region13: #{feed_forward.1} parent=1 // pred_fallthru
      _
    // Predicated region
    $region14: #{feed_forward.1} parent=1 // pred_check
      _
    $region15: #{feed_forward.1} parent=1 // pred_check_branch
      %18 = sbr.rel (0) target = $region17
    $region16: #{feed_forward.1} parent=1 // pred_region
      _
    $region17: #{feed_forward.1} parent=1 // pred_fallthru
      _
    // Predicated region
    $region18: #{feed_forward.1} parent=1 // pred_check
      _
    $region19: #{feed_forward.1} parent=1 // pred_check_branch
      %20 = sbr.rel (0) target = $region21
    $region20: #{feed_forward.1} parent=1 // pred_region
      _
    $region21: #{feed_forward.1} parent=1 // pred_fallthru
      _
    %v21 = vld [vmem:[%s0] sm:$0xff]
    %v22 = vld [vmem:[%s0 + $0x8] sm:$0xff]
    %v23 = vld [vmem:[%s0 + $0x10] sm:$0xff]
    %v24 = vld [vmem:[%s0 + $0x18] sm:$0xff]
    %v25 = vpack.c.bf16 %v23, %v21
    %v26 = vpack.c.bf16 %v24, %v22
    %v27 = vld [vmem:[%s1] sm:$0xff]
    %v28 = vld [vmem:[%s1 + $0x8] sm:$0xff]
    %v29 = vld [vmem:[%s1 + $0x10] sm:$0xff]
    %v30 = vld [vmem:[%s1 + $0x18] sm:$0xff]
    %v31 = vld [vmem:[%s1 + $0x20] sm:$0xff]
    %v32 = vld [vmem:[%s1 + $0x28] sm:$0xff]
    %v33 = vld [vmem:[%s1 + $0x30] sm:$0xff]
    %v34 = vld [vmem:[%s1 + $0x38] sm:$0xff]
    %v35 = vld [vmem:[%s1 + $0x40] sm:$0xff]
    %v36 = vld [vmem:[%s1 + $0x48] sm:$0xff]
    %v37 = vld [vmem:[%s1 + $0x50] sm:$0xff]
    %v38 = vld [vmem:[%s1 + $0x58] sm:$0xff]
    %v39 = vld [vmem:[%s1 + $0x60] sm:$0xff]
    %v40 = vld [vmem:[%s1 + $0x68] sm:$0xff]
    %v41 = vld [vmem:[%s1 + $0x70] sm:$0xff]
    %v42 = vld [vmem:[%s1 + $0x78] sm:$0xff]
    %v43 = vld [vmem:[%s1 + $0x80] sm:$0xff]
    %v44 = vld [vmem:[%s1 + $0x88] sm:$0xff]
    %v45 = vld [vmem:[%s1 + $0x90] sm:$0xff]
    %v46 = vld [vmem:[%s1 + $0x98] sm:$0xff]
    %v47 = vld [vmem:[%s1 + $0xa0] sm:$0xff]
    %v48 = vld [vmem:[%s1 + $0xa8] sm:$0xff]
    %v49 = vld [vmem:[%s1 + $0xb0] sm:$0xff]
    %v50 = vld [vmem:[%s1 + $0xb8] sm:$0xff]
    %v51 = vld [vmem:[%s1 + $0xc0] sm:$0xff]
    %v52 = vld [vmem:[%s1 + $0xc8] sm:$0xff]
    %v53 = vld [vmem:[%s1 + $0xd0] sm:$0xff]
    %v54 = vld [vmem:[%s1 + $0xd8] sm:$0xff]
    %v55 = vld [vmem:[%s1 + $0xe0] sm:$0xff]
    %v56 = vld [vmem:[%s1 + $0xe8] sm:$0xff]
    %v57 = vld [vmem:[%s1 + $0xf0] sm:$0xff]
    %v58 = vld [vmem:[%s1 + $0xf8] sm:$0xff]
    %v59 = vld [vmem:[%s2] sm:$0x3]
    %v61 = vperm.slane %v59, 0
    %v62 = vperm.slane %v59, 1
    %v97 = vunpack.c.l.b16 %v27
    %v98 = vunpack.c.h.b16 %v27
    %v99 = vunpack.c.l.b16 %v28
    %v100 = vunpack.c.h.b16 %v28
    %v101 = vunpack.c.l.b16 %v29
    %v102 = vunpack.c.h.b16 %v29
    %v103 = vunpack.c.l.b16 %v30
    %v104 = vunpack.c.h.b16 %v30
    %v105 = vunpack.c.l.b16 %v31
    %v106 = vunpack.c.h.b16 %v31
    %v107 = vunpack.c.l.b16 %v32
    %v108 = vunpack.c.h.b16 %v32
    %v109 = vunpack.c.l.b16 %v33
    %v110 = vunpack.c.h.b16 %v33
    %v111 = vunpack.c.l.b16 %v34
    %v112 = vunpack.c.h.b16 %v34
    %v113 = vunpack.c.l.b16 %v35
    %v114 = vunpack.c.h.b16 %v35
    %v115 = vunpack.c.l.b16 %v36
    %v116 = vunpack.c.h.b16 %v36
    %v117 = vunpack.c.l.b16 %v37
    %v118 = vunpack.c.h.b16 %v37
    %v119 = vunpack.c.l.b16 %v38
    %v120 = vunpack.c.h.b16 %v38
    %v121 = vunpack.c.l.b16 %v39
    %v122 = vunpack.c.h.b16 %v39
    %v123 = vunpack.c.l.b16 %v40
    %v124 = vunpack.c.h.b16 %v40
    %v125 = vunpack.c.l.b16 %v41
    %v126 = vunpack.c.h.b16 %v41
    %v127 = vunpack.c.l.b16 %v42
    %v128 = vunpack.c.h.b16 %v42
    %v129 = vunpack.c.l.b16 %v43
    %v130 = vunpack.c.h.b16 %v43
    %v131 = vunpack.c.l.b16 %v44
    %v132 = vunpack.c.h.b16 %v44
    %v133 = vunpack.c.l.b16 %v45
    %v134 = vunpack.c.h.b16 %v45
    %v135 = vunpack.c.l.b16 %v46
    %v136 = vunpack.c.h.b16 %v46
    %v137 = vunpack.c.l.b16 %v47
    %v138 = vunpack.c.h.b16 %v47
    %v139 = vunpack.c.l.b16 %v48
    %v140 = vunpack.c.h.b16 %v48
    %v141 = vunpack.c.l.b16 %v49
    %v142 = vunpack.c.h.b16 %v49
    %v143 = vunpack.c.l.b16 %v50
    %v144 = vunpack.c.h.b16 %v50
    %v145 = vunpack.c.l.b16 %v51
    %v146 = vunpack.c.h.b16 %v51
    %v147 = vunpack.c.l.b16 %v52
    %v148 = vunpack.c.h.b16 %v52
    %v149 = vunpack.c.l.b16 %v53
    %v150 = vunpack.c.h.b16 %v53
    %v151 = vunpack.c.l.b16 %v54
    %v152 = vunpack.c.h.b16 %v54
    %v153 = vunpack.c.l.b16 %v55
    %v154 = vunpack.c.h.b16 %v55
    %v155 = vunpack.c.l.b16 %v56
    %v156 = vunpack.c.h.b16 %v56
    %v157 = vunpack.c.l.b16 %v57
    %v158 = vunpack.c.h.b16 %v57
    %v159 = vunpack.c.l.b16 %v58
    %v160 = vunpack.c.h.b16 %v58
    %v161 = vpack.c.b16 %v99, %v97
    %v162 = vpack.c.b16 %v100, %v98
    %v163 = vpack.c.b16 %v103, %v101
    %v164 = vpack.c.b16 %v104, %v102
    %v165 = vpack.c.b16 %v107, %v105
    %v166 = vpack.c.b16 %v108, %v106
    %v167 = vpack.c.b16 %v111, %v109
    %v168 = vpack.c.b16 %v112, %v110
    %v169 = vpack.c.b16 %v115, %v113
    %v170 = vpack.c.b16 %v116, %v114
    %v171 = vpack.c.b16 %v119, %v117
    %v172 = vpack.c.b16 %v120, %v118
    %v173 = vpack.c.b16 %v123, %v121
    %v174 = vpack.c.b16 %v124, %v122
    %v175 = vpack.c.b16 %v127, %v125
    %v176 = vpack.c.b16 %v128, %v126
    %v177 = vpack.c.b16 %v131, %v129
    %v178 = vpack.c.b16 %v132, %v130
    %v179 = vpack.c.b16 %v135, %v133
    %v180 = vpack.c.b16 %v136, %v134
    %v181 = vpack.c.b16 %v139, %v137
    %v182 = vpack.c.b16 %v140, %v138
    %v183 = vpack.c.b16 %v143, %v141
    %v184 = vpack.c.b16 %v144, %v142
    %v185 = vpack.c.b16 %v147, %v145
    %v186 = vpack.c.b16 %v148, %v146
    %v187 = vpack.c.b16 %v151, %v149
    %v188 = vpack.c.b16 %v152, %v150
    %v189 = vpack.c.b16 %v155, %v153
    %v190 = vpack.c.b16 %v156, %v154
    %v191 = vpack.c.b16 %v159, %v157
    %v192 = vpack.c.b16 %v160, %v158
    %225 = vmatpush.bf16.msra.mxu0 %v175
    %226 = vmatpush.bf16.msra.mxu0 %v173
    %227 = vmatpush.bf16.msra.mxu0 %v171
    %228 = vmatpush.bf16.msra.mxu0 %v169
    %229 = vmatpush.bf16.msra.mxu0 %v167
    %230 = vmatpush.bf16.msra.mxu0 %v165
    %231 = vmatpush.bf16.msra.mxu0 %v163
    %232 = vmatpush.bf16.msra.mxu0 %v161
    %233 = vmatmul.bf16.gmra.mxu0 %v25
    %v234 = vpop.f32.mrf.mxu0
    %v235 = vadd.f32 %v61, %v234
    %v236 = vpop.f32.mrf.mxu0
    %v237 = vadd.f32 %v61, %v236
    %238 = vdwg.mxu0
    %239 = vmatpush.bf16.msra.mxu0 %v191
    %240 = vmatpush.bf16.msra.mxu0 %v189
    %241 = vmatpush.bf16.msra.mxu0 %v187
    %242 = vmatpush.bf16.msra.mxu0 %v185
    %243 = vmatpush.bf16.msra.mxu0 %v183
    %244 = vmatpush.bf16.msra.mxu0 %v181
    %245 = vmatpush.bf16.msra.mxu0 %v179
    %246 = vmatpush.bf16.msra.mxu0 %v177
    %247 = vmatmul.bf16.gmra.mxu0 %v26
    %v248 = vpop.f32.mrf.mxu0
    %v249 = vadd.f32 %v235, %v248
    %v250 = vpop.f32.mrf.mxu0
    %v251 = vadd.f32 %v237, %v250
    %252 = vdwg.mxu0
    %253 = vmatpush.bf16.msra.mxu0 %v176
    %254 = vmatpush.bf16.msra.mxu0 %v174
    %255 = vmatpush.bf16.msra.mxu0 %v172
    %256 = vmatpush.bf16.msra.mxu0 %v170
    %257 = vmatpush.bf16.msra.mxu0 %v168
    %258 = vmatpush.bf16.msra.mxu0 %v166
    %259 = vmatpush.bf16.msra.mxu0 %v164
    %260 = vmatpush.bf16.msra.mxu0 %v162
    %261 = vmatmul.bf16.gmra.mxu0 %v25
    %v262 = vpop.f32.mrf.mxu0
    %v263 = vadd.f32 %v62, %v262
    %v264 = vpop.f32.mrf.mxu0
    %v265 = vadd.f32 %v62, %v264
    %266 = vdwg.mxu0
    %267 = vmatpush.bf16.msra.mxu0 %v192
    %268 = vmatpush.bf16.msra.mxu0 %v190
    %269 = vmatpush.bf16.msra.mxu0 %v188
    %270 = vmatpush.bf16.msra.mxu0 %v186
    %271 = vmatpush.bf16.msra.mxu0 %v184
    %272 = vmatpush.bf16.msra.mxu0 %v182
    %273 = vmatpush.bf16.msra.mxu0 %v180
    %274 = vmatpush.bf16.msra.mxu0 %v178
    %275 = vmatmul.bf16.gmra.mxu0 %v26
    %v276 = vpop.f32.mrf.mxu0
    %v277 = vadd.f32 %v263, %v276
    %v278 = vpop.f32.mrf.mxu0
    %v279 = vadd.f32 %v265, %v278
    %280 = vdwg.mxu0
    %v281 = vmax.f32 %v249, 0.0
    %v282 = vmax.f32 %v277, 0.0
    %v283 = vmax.f32 %v251, 0.0
    %v284 = vmax.f32 %v279, 0.0
    %v285 = vpack.c.bf16 %v283, %v281
    %v286 = vpack.c.bf16 %v284, %v282
    %v287 = vld [vmem:[%s3] sm:$0xff]
    %v288 = vld [vmem:[%s3 + $0x8] sm:$0xff]
    %v289 = vld [vmem:[%s3 + $0x10] sm:$0xff]
    %v290 = vld [vmem:[%s3 + $0x18] sm:$0xff]
    %v291 = vld [vmem:[%s3 + $0x20] sm:$0xff]
    %v292 = vld [vmem:[%s3 + $0x28] sm:$0xff]
    %v293 = vld [vmem:[%s3 + $0x30] sm:$0xff]
    %v294 = vld [vmem:[%s3 + $0x38] sm:$0xff]
    %v295 = vld [vmem:[%s3 + $0x40] sm:$0xff]
    %v296 = vld [vmem:[%s3 + $0x48] sm:$0xff]
    %v297 = vld [vmem:[%s3 + $0x50] sm:$0xff]
    %v298 = vld [vmem:[%s3 + $0x58] sm:$0xff]
    %v299 = vld [vmem:[%s3 + $0x60] sm:$0xff]
    %v300 = vld [vmem:[%s3 + $0x68] sm:$0xff]
    %v301 = vld [vmem:[%s3 + $0x70] sm:$0xff]
    %v302 = vld [vmem:[%s3 + $0x78] sm:$0xff]
    %v303 = vld [vmem:[%s3 + $0x80] sm:$0xff]
    %v304 = vld [vmem:[%s3 + $0x88] sm:$0xff]
    %v305 = vld [vmem:[%s3 + $0x90] sm:$0xff]
    %v306 = vld [vmem:[%s3 + $0x98] sm:$0xff]
    %v307 = vld [vmem:[%s3 + $0xa0] sm:$0xff]
    %v308 = vld [vmem:[%s3 + $0xa8] sm:$0xff]
    %v309 = vld [vmem:[%s3 + $0xb0] sm:$0xff]
    %v310 = vld [vmem:[%s3 + $0xb8] sm:$0xff]
    %v311 = vld [vmem:[%s3 + $0xc0] sm:$0xff]
    %v312 = vld [vmem:[%s3 + $0xc8] sm:$0xff]
    %v313 = vld [vmem:[%s3 + $0xd0] sm:$0xff]
    %v314 = vld [vmem:[%s3 + $0xd8] sm:$0xff]
    %v315 = vld [vmem:[%s3 + $0xe0] sm:$0xff]
    %v316 = vld [vmem:[%s3 + $0xe8] sm:$0xff]
    %v317 = vld [vmem:[%s3 + $0xf0] sm:$0xff]
    %v318 = vld [vmem:[%s3 + $0xf8] sm:$0xff]
    %v319 = vld [vmem:[%s4] sm:$0x3]
    %v321 = vperm.slane %v319, 0
    %v322 = vperm.slane %v319, 1
    %v357 = vunpack.c.l.b16 %v287
    %v358 = vunpack.c.h.b16 %v287
    %v359 = vunpack.c.l.b16 %v288
    %v360 = vunpack.c.h.b16 %v288
    %v361 = vunpack.c.l.b16 %v289
    %v362 = vunpack.c.h.b16 %v289
    %v363 = vunpack.c.l.b16 %v290
    %v364 = vunpack.c.h.b16 %v290
    %v365 = vunpack.c.l.b16 %v291
    %v366 = vunpack.c.h.b16 %v291
    %v367 = vunpack.c.l.b16 %v292
    %v368 = vunpack.c.h.b16 %v292
    %v369 = vunpack.c.l.b16 %v293
    %v370 = vunpack.c.h.b16 %v293
    %v371 = vunpack.c.l.b16 %v294
    %v372 = vunpack.c.h.b16 %v294
    %v373 = vunpack.c.l.b16 %v295
    %v374 = vunpack.c.h.b16 %v295
    %v375 = vunpack.c.l.b16 %v296
    %v376 = vunpack.c.h.b16 %v296
    %v377 = vunpack.c.l.b16 %v297
    %v378 = vunpack.c.h.b16 %v297
    %v379 = vunpack.c.l.b16 %v298
    %v380 = vunpack.c.h.b16 %v298
    %v381 = vunpack.c.l.b16 %v299
    %v382 = vunpack.c.h.b16 %v299
    %v383 = vunpack.c.l.b16 %v300
    %v384 = vunpack.c.h.b16 %v300
    %v385 = vunpack.c.l.b16 %v301
    %v386 = vunpack.c.h.b16 %v301
    %v387 = vunpack.c.l.b16 %v302
    %v388 = vunpack.c.h.b16 %v302
    %v389 = vunpack.c.l.b16 %v303
    %v390 = vunpack.c.h.b16 %v303
    %v391 = vunpack.c.l.b16 %v304
    %v392 = vunpack.c.h.b16 %v304
    %v393 = vunpack.c.l.b16 %v305
    %v394 = vunpack.c.h.b16 %v305
    %v395 = vunpack.c.l.b16 %v306
    %v396 = vunpack.c.h.b16 %v306
    %v397 = vunpack.c.l.b16 %v307
    %v398 = vunpack.c.h.b16 %v307
    %v399 = vunpack.c.l.b16 %v308
    %v400 = vunpack.c.h.b16 %v308
    %v401 = vunpack.c.l.b16 %v309
    %v402 = vunpack.c.h.b16 %v309
    %v403 = vunpack.c.l.b16 %v310
    %v404 = vunpack.c.h.b16 %v310
    %v405 = vunpack.c.l.b16 %v311
    %v406 = vunpack.c.h.b16 %v311
    %v407 = vunpack.c.l.b16 %v312
    %v408 = vunpack.c.h.b16 %v312
    %v409 = vunpack.c.l.b16 %v313
    %v410 = vunpack.c.h.b16 %v313
    %v411 = vunpack.c.l.b16 %v314
    %v412 = vunpack.c.h.b16 %v314
    %v413 = vunpack.c.l.b16 %v315
    %v414 = vunpack.c.h.b16 %v315
    %v415 = vunpack.c.l.b16 %v316
    %v416 = vunpack.c.h.b16 %v316
    %v417 = vunpack.c.l.b16 %v317
    %v418 = vunpack.c.h.b16 %v317
    %v419 = vunpack.c.l.b16 %v318
    %v420 = vunpack.c.h.b16 %v318
    %v421 = vpack.c.b16 %v359, %v357
    %v422 = vpack.c.b16 %v360, %v358
    %v423 = vpack.c.b16 %v363, %v361
    %v424 = vpack.c.b16 %v364, %v362
    %v425 = vpack.c.b16 %v367, %v365
    %v426 = vpack.c.b16 %v368, %v366
    %v427 = vpack.c.b16 %v371, %v369
    %v428 = vpack.c.b16 %v372, %v370
    %v429 = vpack.c.b16 %v375, %v373
    %v430 = vpack.c.b16 %v376, %v374
    %v431 = vpack.c.b16 %v379, %v377
    %v432 = vpack.c.b16 %v380, %v378
    %v433 = vpack.c.b16 %v383, %v381
    %v434 = vpack.c.b16 %v384, %v382
    %v435 = vpack.c.b16 %v387, %v385
    %v436 = vpack.c.b16 %v388, %v386
    %v437 = vpack.c.b16 %v391, %v389
    %v438 = vpack.c.b16 %v392, %v390
    %v439 = vpack.c.b16 %v395, %v393
    %v440 = vpack.c.b16 %v396, %v394
    %v441 = vpack.c.b16 %v399, %v397
    %v442 = vpack.c.b16 %v400, %v398
    %v443 = vpack.c.b16 %v403, %v401
    %v444 = vpack.c.b16 %v404, %v402
    %v445 = vpack.c.b16 %v407, %v405
    %v446 = vpack.c.b16 %v408, %v406
    %v447 = vpack.c.b16 %v411, %v409
    %v448 = vpack.c.b16 %v412, %v410
    %v449 = vpack.c.b16 %v415, %v413
    %v450 = vpack.c.b16 %v416, %v414
    %v451 = vpack.c.b16 %v419, %v417
    %v452 = vpack.c.b16 %v420, %v418
    %485 = vmatpush.bf16.msra.mxu0 %v435
    %486 = vmatpush.bf16.msra.mxu0 %v433
    %487 = vmatpush.bf16.msra.mxu0 %v431
    %488 = vmatpush.bf16.msra.mxu0 %v429
    %489 = vmatpush.bf16.msra.mxu0 %v427
    %490 = vmatpush.bf16.msra.mxu0 %v425
    %491 = vmatpush.bf16.msra.mxu0 %v423
    %492 = vmatpush.bf16.msra.mxu0 %v421
    %493 = vmatmul.bf16.gmra.mxu0 %v285
    %v494 = vpop.f32.mrf.mxu0
    %v495 = vadd.f32 %v321, %v494
    %v496 = vpop.f32.mrf.mxu0
    %v497 = vadd.f32 %v321, %v496
    %498 = vdwg.mxu0
    %499 = vmatpush.bf16.msra.mxu0 %v451
    %500 = vmatpush.bf16.msra.mxu0 %v449
    %501 = vmatpush.bf16.msra.mxu0 %v447
    %502 = vmatpush.bf16.msra.mxu0 %v445
    %503 = vmatpush.bf16.msra.mxu0 %v443
    %504 = vmatpush.bf16.msra.mxu0 %v441
    %505 = vmatpush.bf16.msra.mxu0 %v439
    %506 = vmatpush.bf16.msra.mxu0 %v437
    %507 = vmatmul.bf16.gmra.mxu0 %v286
    %v508 = vpop.f32.mrf.mxu0
    %v509 = vadd.f32 %v495, %v508
    %v510 = vpop.f32.mrf.mxu0
    %v511 = vadd.f32 %v497, %v510
    %512 = vdwg.mxu0
    %513 = vmatpush.bf16.msra.mxu0 %v436
    %514 = vmatpush.bf16.msra.mxu0 %v434
    %515 = vmatpush.bf16.msra.mxu0 %v432
    %516 = vmatpush.bf16.msra.mxu0 %v430
    %517 = vmatpush.bf16.msra.mxu0 %v428
    %518 = vmatpush.bf16.msra.mxu0 %v426
    %519 = vmatpush.bf16.msra.mxu0 %v424
    %520 = vmatpush.bf16.msra.mxu0 %v422
    %521 = vmatmul.bf16.gmra.mxu0 %v285
    %v522 = vpop.f32.mrf.mxu0
    %v523 = vadd.f32 %v322, %v522
    %v524 = vpop.f32.mrf.mxu0
    %v525 = vadd.f32 %v322, %v524
    %526 = vdwg.mxu0
    %527 = vmatpush.bf16.msra.mxu0 %v452
    %528 = vmatpush.bf16.msra.mxu0 %v450
    %529 = vmatpush.bf16.msra.mxu0 %v448
    %530 = vmatpush.bf16.msra.mxu0 %v446
    %531 = vmatpush.bf16.msra.mxu0 %v444
    %532 = vmatpush.bf16.msra.mxu0 %v442
    %533 = vmatpush.bf16.msra.mxu0 %v440
    %534 = vmatpush.bf16.msra.mxu0 %v438
    %535 = vmatmul.bf16.gmra.mxu0 %v286
    %v536 = vpop.f32.mrf.mxu0
    %v537 = vadd.f32 %v523, %v536
    %v538 = vpop.f32.mrf.mxu0
    %v539 = vadd.f32 %v525, %v538
    %540 = vdwg.mxu0
    %541 = vst [vmem:[#allocation2] sm:$0xff] %v509
    %542 = vst [vmem:[#allocation2 + $0x8] sm:$0xff] %v537
    %543 = vst [vmem:[#allocation2 + $0x10] sm:$0xff] %v511
    %544 = vst [vmem:[#allocation2 + $0x18] sm:$0xff] %v539
    // Predicated region
    $region22: #{feed_forward.1} parent=1 // pred_check
      _
    $region23: #{feed_forward.1} parent=1 // pred_check_branch
      %546 = sbr.rel (0) target = $region25
    $region24: #{feed_forward.1} parent=1 // pred_region
      %548 = vsyncadd [#allocation3], 0
      %s549 = sshll.u32 [#allocation2], 4
      %s550 = int_to_ptr.vmem [resolvable:$true] %s549
      %s551 = sshll.u32 %s5, 4
      %s552 = int_to_ptr.hbm [resolvable:$true] %s551
      %557 = dma.vmem_to_hbm [thread:$0]  %s550, 512, %s552, [#allocation3], 256, 256, 16
    $region25: #{feed_forward.1} parent=1 // pred_fallthru
      _
    // Predicated region
    $region26: #{feed_forward.1} parent=1 // pred_check
      _
    $region27: #{feed_forward.1} parent=1 // pred_check_branch
      %559 = sbr.rel (0) target = $region29
    $region28: #{feed_forward.1} parent=1 // pred_region
      %561 = dma.done [#allocation3], 512
    $region29: #{feed_forward.1} parent=1 // pred_fallthru
      _
    %562 = vsyncpa [#allocation3], 1

</llo_original>
